<compile_context>
chip_gen: v5e
topology: v5e:2x2
jax: 0.10.0
libtpu: 0.0.40
codegen_flags: <defaults>
</compile_context>

<pallas_src>
import jax
import jax.numpy as jnp
from jax.experimental import pallas as pl
from jax.experimental.pallas import tpu as pltpu

NEG_SLOPE = 0.01   # PyTorch nn.LeakyReLU default negative_slope
IN_DIM = 2
HID = 100
OUT_DIM = 2
PAD = 128          # lane width / padded feature dim


def _leaky_relu(x):
    # LeakyReLU(0.01) == max(x, 0.01 * x): one VALU max, no select/mask needed.
    return jnp.maximum(x, NEG_SLOPE * x)


def _round_up(n, m):
    return ((n + m - 1) // m) * m


# ----------------------------------------------------------------------------- kernel


def generator_kernel(x_ref, w1_ref, b1_ref, w2_ref, b2_ref, w3_ref, b3_ref, o_ref):
    x = x_ref[...]                                         # [TILE_B, 2]   f32
    w1 = w1_ref[...]                                       # [8, 128]      f32 (rows 0..1 live)

    # ---- layer 1: Linear(2, 100) on the VPU ---------------------------------
    # A K=2 contraction would use <2% of the MXU; two broadcast multiply-adds on
    # otherwise-idle VALU slots are cheaper and skip the MXU round-trip.
    h1 = x[:, 0:1] * w1[0:1, :] + x[:, 1:2] * w1[1:2, :] + b1_ref[...]
    h1 = _leaky_relu(h1)                                   # [TILE_B, 128] (cols >= 100 are 0)

    # ---- layer 2: Linear(100, 100) on the MXU (bf16 inputs, f32 accumulate) --
    h2 = jnp.dot(h1.astype(jnp.bfloat16), w2_ref[...],
                 preferred_element_type=jnp.float32)
    h2 = _leaky_relu(h2 + b2_ref[...])                     # [TILE_B, 128]

    # ---- layer 3: Linear(100, 2), padded to 128 outputs -> unmasked lane-dense store
    y = jnp.dot(h2.astype(jnp.bfloat16), w3_ref[...],
                preferred_element_type=jnp.float32)
    o_ref[...] = (y + b3_ref[...]).astype(o_ref.dtype)     # [TILE_B, 128]


# ----------------------------------------------------------------------------- wrapper


def prepare_params(params):
    """Zero-pad weights/biases once to 128-lane shapes; MXU weights pre-cast to bf16.

    Zero padding is exact: padded h1/h2 columns are leaky_relu(0) == 0 and padded
    w rows/cols contribute nothing, so the first 2 output columns equal the logical model.
    """
    def pad2d(a, rows, cols, dtype):
        out = jnp.zeros((rows, cols), dtype)
        return out.at[: a.shape[0], : a.shape[1]].set(a.astype(dtype))

    return {
        "w1": pad2d(params["w1"], 8, PAD, jnp.float32),
        "b1": pad2d(params["b1"], 1, PAD, jnp.float32),
        "w2": pad2d(params["w2"], PAD, PAD, jnp.bfloat16),
        "b2": pad2d(params["b2"], 1, PAD, jnp.float32),
        "w3": pad2d(params["w3"], PAD, PAD, jnp.bfloat16),
        "b3": pad2d(params["b3"], 1, PAD, jnp.float32),
    }


def generator_forward(x, prepped, *, tile_b=256):
    """x: [B, 2] float32.  prepped: output of prepare_params().  Returns [B, 2] float32."""
    B = x.shape[0]
    # Tile must be a multiple of 8 (sublane) and not exceed the (padded) batch.
    tile_b = _round_up(min(tile_b, _round_up(B, 8)), 8)
    b_pad = _round_up(B, tile_b)
    x_pad = jnp.pad(x, ((0, b_pad - B), (0, 0))) if b_pad != B else x

    grid = (b_pad // tile_b,)
    full_block = lambda i: (0, 0)   # weights / biases: same (only) block every step

    flops = 2 * b_pad * (IN_DIM * HID + HID * HID + HID * OUT_DIM)
    bytes_accessed = (
        x_pad.size * 4                      # x in
        + b_pad * PAD * 4                   # padded output
        + 8 * PAD * 4                       # w1
        + 2 * PAD * PAD * 2                 # w2, w3 (bf16)
        + 3 * PAD * 4                       # biases
    )

    out = pl.pallas_call(
        generator_kernel,
        out_shape=jax.ShapeDtypeStruct((b_pad, PAD), x.dtype),
        grid_spec=pltpu.PrefetchScalarGridSpec(
            num_scalar_prefetch=0,
            grid=grid,
            in_specs=[
                pl.BlockSpec((tile_b, IN_DIM), lambda i: (i, 0)),  # x (tiled over batch)
                pl.BlockSpec((8, PAD), full_block),                # w1 (resident)
                pl.BlockSpec((1, PAD), full_block),                # b1
                pl.BlockSpec((PAD, PAD), full_block),              # w2
                pl.BlockSpec((1, PAD), full_block),                # b2
                pl.BlockSpec((PAD, PAD), full_block),              # w3
                pl.BlockSpec((1, PAD), full_block),                # b3
            ],
            out_specs=pl.BlockSpec((tile_b, PAD), lambda i: (i, 0)),
        ),
        compiler_params=pltpu.CompilerParams(
            # Batch tiles are independent -> shard across v7x's two TensorCores.
            dimension_semantics=("parallel",),
        ),
        cost_estimate=pl.CostEstimate(
            flops=flops, transcendentals=0, bytes_accessed=bytes_accessed),
    )(x_pad, prepped["w1"], prepped["b1"], prepped["w2"], prepped["b2"],
      prepped["w3"], prepped["b3"])

    return out[:B, :OUT_DIM]


# ----------------------------------------------------------------------------- init & refs


def init_params(key):
    """Deterministic init mimicking PyTorch Linear (uniform in +/- 1/sqrt(fan_in)).
    Weights stored as [in_features, out_features]."""
    def linear(key, fan_in, fan_out):
        kw, kb = jax.random.split(key)
        bound = 1.0 / jnp.sqrt(fan_in)
        w = jax.random.uniform(kw, (fan_in, fan_out), jnp.float32, -bound, bound)
        b = jax.random.uniform(kb, (1, fan_out), jnp.float32, -bound, bound)
        return w, b

    k1, k2, k3 = jax.random.split(key, 3)
    w1, b1 = linear(k1, IN_DIM, HID)
    w2, b2 = linear(k2, HID, HID)
    w3, b3 = linear(k3, HID, OUT_DIM)
    return {"w1": w1, "b1": b1, "w2": w2, "b2": b2, "w3": w3, "b3": b3}


def reference_forward_f32(x, p):
    h1 = _leaky_relu(x @ p["w1"] + p["b1"])
    h2 = _leaky_relu(h1 @ p["w2"] + p["b2"])
    return h2 @ p["w3"] + p["b3"]


def reference_forward_bf16(x, p):
    """Pure-JAX reference matching the kernel's numerics (bf16 MXU inputs, f32 accumulate)."""
    h1 = _leaky_relu(x @ p["w1"] + p["b1"])
    h2 = _leaky_relu(
        jnp.dot(h1.astype(jnp.bfloat16), p["w2"].astype(jnp.bfloat16),
                preferred_element_type=jnp.float32) + p["b2"])
    return jnp.dot(h2.astype(jnp.bfloat16), p["w3"].astype(jnp.bfloat16),
                   preferred_element_type=jnp.float32) + p["b3"]


# ----------------------------------------------------------------------------- main


if __name__ == "__main__":
    key = jax.random.PRNGKey(0)
    kp, kx = jax.random.split(key)
    params = init_params(kp)
    prepped = prepare_params(params)

    batch = 64
    x = jax.random.normal(kx, (batch, IN_DIM), jnp.float32)

    y = generator_forward(x, prepped, tile_b=256)
    jax.block_until_ready(y)

    assert y.shape == (batch, OUT_DIM)

    # Tight check vs a reference using the same bf16-input / f32-accumulate matmuls.
    y_ref = reference_forward_bf16(x, params)
    assert jnp.allclose(y, y_ref, atol=2e-3, rtol=1e-2), "mismatch vs bf16-matched reference"

    # Loose sanity check vs the pure-f32 reference (bf16 MXU inputs lose some precision).
    y_f32 = reference_forward_f32(x, params)
    assert jnp.allclose(y, y_f32, atol=1e-1, rtol=1e-1), "mismatch vs f32 reference"

    print("KERNEL_OK")
</pallas_src>

<mosaic_0001>
module attributes {stable_mosaic.version = 11 : i64} {
  func.func @generator_kernel(%arg0: i32, %arg1: memref<64x2xf32, #tpu.memory_space<vmem>>, %arg2: memref<8x128xf32, #tpu.memory_space<vmem>>, %arg3: memref<1x128xf32, #tpu.memory_space<vmem>>, %arg4: memref<128x128xbf16, #tpu.memory_space<vmem>>, %arg5: memref<1x128xf32, #tpu.memory_space<vmem>>, %arg6: memref<128x128xbf16, #tpu.memory_space<vmem>>, %arg7: memref<1x128xf32, #tpu.memory_space<vmem>>, %arg8: memref<64x128xf32, #tpu.memory_space<vmem>>) attributes {dimension_semantics = [#tpu.dimension_semantics<parallel>], iteration_bounds = array<i64: 1>, scalar_prefetch = 0 : i64, scratch_operands = 0 : i64, tpu.core_type = #tpu.core_type<tc>, window_params = [{transform_indices = @transform_0, window_bounds = array<i64: 64, 2>}, {pipeline_mode = #tpu.pipeline_mode<synchronous>, transform_indices = @transform_1, window_bounds = array<i64: 8, 128>}, {pipeline_mode = #tpu.pipeline_mode<synchronous>, transform_indices = @transform_2, window_bounds = array<i64: 1, 128>}, {pipeline_mode = #tpu.pipeline_mode<synchronous>, transform_indices = @transform_3, window_bounds = array<i64: 128, 128>}, {pipeline_mode = #tpu.pipeline_mode<synchronous>, transform_indices = @transform_4, window_bounds = array<i64: 1, 128>}, {pipeline_mode = #tpu.pipeline_mode<synchronous>, transform_indices = @transform_5, window_bounds = array<i64: 128, 128>}, {pipeline_mode = #tpu.pipeline_mode<synchronous>, transform_indices = @transform_6, window_bounds = array<i64: 1, 128>}, {transform_indices = @transform_7, window_bounds = array<i64: 64, 128>}]} {
    %c0 = arith.constant 0 : index
    %c0_0 = arith.constant 0 : index
    %0 = vector.load %arg1[%c0, %c0_0] : memref<64x2xf32, #tpu.memory_space<vmem>>, vector<64x2xf32>
    %c0_1 = arith.constant 0 : index
    %c0_2 = arith.constant 0 : index
    %1 = vector.load %arg2[%c0_1, %c0_2] : memref<8x128xf32, #tpu.memory_space<vmem>>, vector<8x128xf32>
    %2 = vector.extract_strided_slice %0 {offsets = [0, 0], sizes = [64, 1], strides = [1, 1]} : vector<64x2xf32> to vector<64x1xf32>
    %3 = vector.extract_strided_slice %1 {offsets = [0, 0], sizes = [1, 128], strides = [1, 1]} : vector<8x128xf32> to vector<1x128xf32>
    %4 = vector.broadcast %2 : vector<64x1xf32> to vector<64x128xf32>
    %5 = vector.broadcast %3 : vector<1x128xf32> to vector<64x128xf32>
    %6 = arith.mulf %4, %5 : vector<64x128xf32>
    %7 = vector.extract_strided_slice %0 {offsets = [0, 1], sizes = [64, 1], strides = [1, 1]} : vector<64x2xf32> to vector<64x1xf32>
    %8 = vector.extract_strided_slice %1 {offsets = [1, 0], sizes = [1, 128], strides = [1, 1]} : vector<8x128xf32> to vector<1x128xf32>
    %9 = vector.broadcast %7 : vector<64x1xf32> to vector<64x128xf32>
    %10 = vector.broadcast %8 : vector<1x128xf32> to vector<64x128xf32>
    %11 = arith.mulf %9, %10 : vector<64x128xf32>
    %12 = arith.addf %6, %11 : vector<64x128xf32>
    %c0_3 = arith.constant 0 : index
    %c0_4 = arith.constant 0 : index
    %13 = vector.load %arg3[%c0_3, %c0_4] : memref<1x128xf32, #tpu.memory_space<vmem>>, vector<1x128xf32>
    %14 = vector.broadcast %13 : vector<1x128xf32> to vector<64x128xf32>
    %15 = arith.addf %12, %14 : vector<64x128xf32>
    %cst = arith.constant 0.00999999977 : f32
    %16 = vector.broadcast %cst : f32 to vector<64x128xf32>
    %17 = arith.mulf %16, %15 : vector<64x128xf32>
    %18 = arith.maximumf %15, %17 : vector<64x128xf32>
    %19 = arith.truncf %18 : vector<64x128xf32> to vector<64x128xbf16>
    %c0_5 = arith.constant 0 : index
    %c0_6 = arith.constant 0 : index
    %20 = vector.load %arg4[%c0_5, %c0_6] : memref<128x128xbf16, #tpu.memory_space<vmem>>, vector<128x128xbf16>
    %cst_7 = arith.constant dense<0.000000e+00> : vector<64x128xf32>
    %21 = tpu.matmul %19, %20, %cst_7 {dimension_numbers = #tpu.dot_dimension_numbers<[1], [0], [0], [1], [0, 0, 1, 1], [], []>} : vector<64x128xbf16>, vector<128x128xbf16>, vector<64x128xf32> -> vector<64x128xf32>
    %c0_8 = arith.constant 0 : index
    %c0_9 = arith.constant 0 : index
    %22 = vector.load %arg5[%c0_8, %c0_9] : memref<1x128xf32, #tpu.memory_space<vmem>>, vector<1x128xf32>
    %23 = vector.broadcast %22 : vector<1x128xf32> to vector<64x128xf32>
    %24 = arith.addf %21, %23 : vector<64x128xf32>
    %cst_10 = arith.constant 0.00999999977 : f32
    %25 = vector.broadcast %cst_10 : f32 to vector<64x128xf32>
    %26 = arith.mulf %25, %24 : vector<64x128xf32>
    %27 = arith.maximumf %24, %26 : vector<64x128xf32>
    %28 = arith.truncf %27 : vector<64x128xf32> to vector<64x128xbf16>
    %c0_11 = arith.constant 0 : index
    %c0_12 = arith.constant 0 : index
    %29 = vector.load %arg6[%c0_11, %c0_12] : memref<128x128xbf16, #tpu.memory_space<vmem>>, vector<128x128xbf16>
    %cst_13 = arith.constant dense<0.000000e+00> : vector<64x128xf32>
    %30 = tpu.matmul %28, %29, %cst_13 {dimension_numbers = #tpu.dot_dimension_numbers<[1], [0], [0], [1], [0, 0, 1, 1], [], []>} : vector<64x128xbf16>, vector<128x128xbf16>, vector<64x128xf32> -> vector<64x128xf32>
    %c0_14 = arith.constant 0 : index
    %c0_15 = arith.constant 0 : index
    %31 = vector.load %arg7[%c0_14, %c0_15] : memref<1x128xf32, #tpu.memory_space<vmem>>, vector<1x128xf32>
    %32 = vector.broadcast %31 : vector<1x128xf32> to vector<64x128xf32>
    %33 = arith.addf %30, %32 : vector<64x128xf32>
    %c0_16 = arith.constant 0 : index
    %c0_17 = arith.constant 0 : index
    %34 = vector.load %arg8[%c0_16, %c0_17] : memref<64x128xf32, #tpu.memory_space<vmem>>, vector<64x128xf32>
    tpu.vector_store %arg8[%c0_16, %c0_17], %33 {strides = array<i32>} : memref<64x128xf32, #tpu.memory_space<vmem>>, vector<64x128xf32>,
    return
  }
  func.func @transform_0(%arg0: i32) -> (i32, i32) {
    %c0_i32 = arith.constant 0 : i32
    %c0_i32_0 = arith.constant 0 : i32
    return %arg0, %c0_i32 : i32, i32
  }
  func.func @transform_1(%arg0: i32) -> (i32, i32) {
    %c0_i32 = arith.constant 0 : i32
    %c0_i32_0 = arith.constant 0 : i32
    %c0_i32_1 = arith.constant 0 : i32
    return %c0_i32, %c0_i32_0 : i32, i32
  }
  func.func @transform_2(%arg0: i32) -> (i32, i32) {
    %c0_i32 = arith.constant 0 : i32
    %c0_i32_0 = arith.constant 0 : i32
    %c0_i32_1 = arith.constant 0 : i32
    return %c0_i32, %c0_i32_0 : i32, i32
  }
  func.func @transform_3(%arg0: i32) -> (i32, i32) {
    %c0_i32 = arith.constant 0 : i32
    %c0_i32_0 = arith.constant 0 : i32
    %c0_i32_1 = arith.constant 0 : i32
    return %c0_i32, %c0_i32_0 : i32, i32
  }
  func.func @transform_4(%arg0: i32) -> (i32, i32) {
    %c0_i32 = arith.constant 0 : i32
    %c0_i32_0 = arith.constant 0 : i32
    %c0_i32_1 = arith.constant 0 : i32
    return %c0_i32, %c0_i32_0 : i32, i32
  }
  func.func @transform_5(%arg0: i32) -> (i32, i32) {
    %c0_i32 = arith.constant 0 : i32
    %c0_i32_0 = arith.constant 0 : i32
    %c0_i32_1 = arith.constant 0 : i32
    return %c0_i32, %c0_i32_0 : i32, i32
  }
  func.func @transform_6(%arg0: i32) -> (i32, i32) {
    %c0_i32 = arith.constant 0 : i32
    %c0_i32_0 = arith.constant 0 : i32
    %c0_i32_1 = arith.constant 0 : i32
    return %c0_i32, %c0_i32_0 : i32, i32
  }
  func.func @transform_7(%arg0: i32) -> (i32, i32) {
    %c0_i32 = arith.constant 0 : i32
    %c0_i32_0 = arith.constant 0 : i32
    return %arg0, %c0_i32 : i32, i32
  }
}

</mosaic_0001>

<llo_original>
// kernel: tpu_custom_call.1
$region0: #{tpu_custom_call.1}
  #allocation0 [shape = 'u32[]', space=smem, size = 0x4, offset = 0x4, fixed_abs, tag = 'smem constant byte address 0x4 - core index']
  #allocation1 [shape = 'u32[72,128]{1,0:T(1,128)}', space=vmem, size = 0x9000, scoped, tag = 'internal scratch']
  %s0 = inlined_call_operand.vmem [shape: f32[64,2], index: 0, kind: input, shape index: {}]
  %s1 = inlined_call_operand.hbm [shape: f32[8,128], index: 1, kind: input, shape index: {}]
  %s2 = inlined_call_operand.vmem [shape: f32[1,128], index: 2, kind: input, shape index: {}]
  %s3 = inlined_call_operand.vmem [shape: bf16[128,128], index: 3, kind: input, shape index: {}]
  %s4 = inlined_call_operand.vmem [shape: f32[1,128], index: 4, kind: input, shape index: {}]
  %s5 = inlined_call_operand.hbm [shape: bf16[128,128], index: 5, kind: input, shape index: {}]
  %s6 = inlined_call_operand.vmem [shape: f32[1,128], index: 6, kind: input, shape index: {}]
  %s7 = inlined_call_operand.hbm [shape: f32[64,128], index: 7, kind: output, shape index: {}]
  %s8 = sld [smem:[#allocation0]]
  $region46: #{tpu_custom_call.1} parent=0
    _
  %s10 = ssub.s32 1, %s8
  %s11 = scalar_select 0, %s10, %s8
  $region1: #{tpu_custom_call.1} parent=0
    #allocation2 [shape = 'u8[4096]{0}', space=vmem, size = 0x1000, scoped, tag = 'input window, operand 1, single buffered']
    #allocation3 [shape = 's32[1]{0}', space=sflag, size = 0x4, scoped, tag = 'scoped memory for tpu_custom_call.1']
    #allocation4 [shape = 's32[1]{0}', space=sflag, size = 0x4, scoped, tag = 'scoped memory for tpu_custom_call.1']
    #allocation5 [shape = 'u8[32768]{0}', space=vmem, size = 0x8000, scoped, tag = 'input window, operand 5, single buffered']
    #allocation6 [shape = 's32[1]{0}', space=sflag, size = 0x4, scoped, tag = 'scoped memory for tpu_custom_call.1']
    #allocation7 [shape = 'u8[32768]{0}', space=vmem, size = 0x8000, scoped, tag = 'output window, operand 0, single buffered']
    %12 = vsyncpa [#allocation3], 0
    %13 = vsyncpa [#allocation6], 0
    %14 = vsyncpa [#allocation4], 0
    // Predicated region
    $region2: #{tpu_custom_call.1} parent=1 // pred_check
      _
    $region3: #{tpu_custom_call.1} parent=1 // pred_check_branch
      %16 = sbr.rel (0) target = $region5
    $region4: #{tpu_custom_call.1} parent=1 // pred_region
      _
    $region5: #{tpu_custom_call.1} parent=1 // pred_fallthru
      _
    // Predicated region
    $region6: #{tpu_custom_call.1} parent=1 // pred_check
      _
    $region7: #{tpu_custom_call.1} parent=1 // pred_check_branch
      %18 = sbr.rel (0) target = $region9
    $region8: #{tpu_custom_call.1} parent=1 // pred_region
      %20 = vsyncadd [#allocation3], 0
      %s22 = sshll.u32 %s1, 4
      %s23 = int_to_ptr.hbm [resolvable:$true] %s22
      %s24 = sshll.u32 [#allocation2], 4
      %s25 = int_to_ptr.vmem [resolvable:$true] %s24
      %27 = dma.hbm_to_vmem [thread:$0]  %s23, 128, %s25, [#allocation3]
    $region9: #{tpu_custom_call.1} parent=1 // pred_fallthru
      _
    // Predicated region
    $region10: #{tpu_custom_call.1} parent=1 // pred_check
      _
    $region11: #{tpu_custom_call.1} parent=1 // pred_check_branch
      %29 = sbr.rel (0) target = $region13
    $region12: #{tpu_custom_call.1} parent=1 // pred_region
      _
    $region13: #{tpu_custom_call.1} parent=1 // pred_fallthru
      _
    // Predicated region
    $region14: #{tpu_custom_call.1} parent=1 // pred_check
      _
    $region15: #{tpu_custom_call.1} parent=1 // pred_check_branch
      %31 = sbr.rel (0) target = $region17
    $region16: #{tpu_custom_call.1} parent=1 // pred_region
      _
    $region17: #{tpu_custom_call.1} parent=1 // pred_fallthru
      _
    // Predicated region
    $region18: #{tpu_custom_call.1} parent=1 // pred_check
      _
    $region19: #{tpu_custom_call.1} parent=1 // pred_check_branch
      %33 = sbr.rel (0) target = $region21
    $region20: #{tpu_custom_call.1} parent=1 // pred_region
      _
    $region21: #{tpu_custom_call.1} parent=1 // pred_fallthru
      _
    // Predicated region
    $region22: #{tpu_custom_call.1} parent=1 // pred_check
      _
    $region23: #{tpu_custom_call.1} parent=1 // pred_check_branch
      %35 = sbr.rel (0) target = $region25
    $region24: #{tpu_custom_call.1} parent=1 // pred_region
      %37 = vsyncadd [#allocation6], 0
      %s38 = sshll.u32 %s5, 4
      %s39 = int_to_ptr.hbm [resolvable:$true] %s38
      %s40 = sshll.u32 [#allocation5], 4
      %s41 = int_to_ptr.vmem [resolvable:$true] %s40
      %46 = dma.hbm_to_vmem [thread:$0]  %s39, 1024, %s41, [#allocation6], 64, 64, 4
    $region25: #{tpu_custom_call.1} parent=1 // pred_fallthru
      _
    // Predicated region
    $region26: #{tpu_custom_call.1} parent=1 // pred_check
      _
    $region27: #{tpu_custom_call.1} parent=1 // pred_check_branch
      %48 = sbr.rel (0) target = $region29
    $region28: #{tpu_custom_call.1} parent=1 // pred_region
      _
    $region29: #{tpu_custom_call.1} parent=1 // pred_fallthru
      _
    // Predicated region
    $region30: #{tpu_custom_call.1} parent=1 // pred_check
      _
    $region31: #{tpu_custom_call.1} parent=1 // pred_check_branch
      %50 = sbr.rel (0) target = $region33
    $region32: #{tpu_custom_call.1} parent=1 // pred_region
      %52 = dma.done [#allocation3], 128
    $region33: #{tpu_custom_call.1} parent=1 // pred_fallthru
      _
    // Predicated region
    $region34: #{tpu_custom_call.1} parent=1 // pred_check
      _
    $region35: #{tpu_custom_call.1} parent=1 // pred_check_branch
      %54 = sbr.rel (0) target = $region37
    $region36: #{tpu_custom_call.1} parent=1 // pred_region
      %56 = dma.done [#allocation6], 1024
    $region37: #{tpu_custom_call.1} parent=1 // pred_fallthru
      _
    %v57 = vld [vmem:[%s0] sm:$0xff]
    %v58 = vld [vmem:[%s0 + $0x8] sm:$0xff]
    %v59 = vld [vmem:[%s0 + $0x10] sm:$0xff]
    %v60 = vld [vmem:[%s0 + $0x18] sm:$0xff]
    %v61 = vld [vmem:[%s0 + $0x20] sm:$0xff]
    %v62 = vld [vmem:[%s0 + $0x28] sm:$0xff]
    %v63 = vld [vmem:[%s0 + $0x30] sm:$0xff]
    %v64 = vld [vmem:[%s0 + $0x38] sm:$0xff]
    %v65 = vld [vmem:[#allocation2] sm:$0xff]
    %67 = vset.pattern.permute.xlu0 0
    %68 = vperm.xlu0 %67, %v57
    %v69 = vpop.permute.xlu0 %68
    %72 = vset.pattern.permute.xlu0 0
    %73 = vperm.xlu0 %72, %v58
    %v74 = vpop.permute.xlu0 %73
    %77 = vset.pattern.permute.xlu0 0
    %78 = vperm.xlu0 %77, %v59
    %v79 = vpop.permute.xlu0 %78
    %82 = vset.pattern.permute.xlu0 0
    %83 = vperm.xlu0 %82, %v60
    %v84 = vpop.permute.xlu0 %83
    %87 = vset.pattern.permute.xlu0 0
    %88 = vperm.xlu0 %87, %v61
    %v89 = vpop.permute.xlu0 %88
    %92 = vset.pattern.permute.xlu0 0
    %93 = vperm.xlu0 %92, %v62
    %v94 = vpop.permute.xlu0 %93
    %97 = vset.pattern.permute.xlu0 0
    %98 = vperm.xlu0 %97, %v63
    %v99 = vpop.permute.xlu0 %98
    %102 = vset.pattern.permute.xlu0 0
    %103 = vperm.xlu0 %102, %v64
    %v104 = vpop.permute.xlu0 %103
    %v106 = vperm.slane %v65, 0
    %v107 = vmul.f32 %v69, %v106
    %v108 = vmul.f32 %v74, %v106
    %v109 = vmul.f32 %v79, %v106
    %v110 = vmul.f32 %v84, %v106
    %v111 = vmul.f32 %v89, %v106
    %v112 = vmul.f32 %v94, %v106
    %v113 = vmul.f32 %v99, %v106
    %v114 = vmul.f32 %v104, %v106
    %115 = vset.pattern.permute.xlu0 1
    %116 = vperm.xlu0 %115, %v57
    %v117 = vpop.permute.xlu0 %116
    %119 = vset.pattern.permute.xlu0 1
    %120 = vperm.xlu0 %119, %v58
    %v121 = vpop.permute.xlu0 %120
    %123 = vset.pattern.permute.xlu0 1
    %124 = vperm.xlu0 %123, %v59
    %v125 = vpop.permute.xlu0 %124
    %127 = vset.pattern.permute.xlu0 1
    %128 = vperm.xlu0 %127, %v60
    %v129 = vpop.permute.xlu0 %128
    %131 = vset.pattern.permute.xlu0 1
    %132 = vperm.xlu0 %131, %v61
    %v133 = vpop.permute.xlu0 %132
    %135 = vset.pattern.permute.xlu0 1
    %136 = vperm.xlu0 %135, %v62
    %v137 = vpop.permute.xlu0 %136
    %139 = vset.pattern.permute.xlu0 1
    %140 = vperm.xlu0 %139, %v63
    %v141 = vpop.permute.xlu0 %140
    %143 = vset.pattern.permute.xlu0 1
    %144 = vperm.xlu0 %143, %v64
    %v145 = vpop.permute.xlu0 %144
    %v147 = vperm.slane %v65, 1
    %v148 = vmul.f32 %v117, %v147
    %v149 = vmul.f32 %v121, %v147
    %v150 = vmul.f32 %v125, %v147
    %v151 = vmul.f32 %v129, %v147
    %v152 = vmul.f32 %v133, %v147
    %v153 = vmul.f32 %v137, %v147
    %v154 = vmul.f32 %v141, %v147
    %v155 = vmul.f32 %v145, %v147
    %v156 = vadd.f32 %v107, %v148
    %v157 = vadd.f32 %v108, %v149
    %v158 = vadd.f32 %v109, %v150
    %v159 = vadd.f32 %v110, %v151
    %v160 = vadd.f32 %v111, %v152
    %v161 = vadd.f32 %v112, %v153
    %v162 = vadd.f32 %v113, %v154
    %v163 = vadd.f32 %v114, %v155
    %v164 = vld [vmem:[%s2] sm:$0x1]
    %v166 = vperm.slane %v164, 0
    %v168 = vadd.f32 %v156, %v166
    %v169 = vadd.f32 %v157, %v166
    %v170 = vadd.f32 %v158, %v166
    %v171 = vadd.f32 %v159, %v166
    %v172 = vadd.f32 %v160, %v166
    %v173 = vadd.f32 %v161, %v166
    %v174 = vadd.f32 %v162, %v166
    %v175 = vadd.f32 %v163, %v166
    %v176 = vmul.f32 %v168, 0.01
    %v177 = vmul.f32 %v169, 0.01
    %v178 = vmul.f32 %v170, 0.01
    %v179 = vmul.f32 %v171, 0.01
    %v180 = vmul.f32 %v172, 0.01
    %v181 = vmul.f32 %v173, 0.01
    %v182 = vmul.f32 %v174, 0.01
    %v183 = vmul.f32 %v175, 0.01
    %v184 = vmax.f32 %v168, %v176
    %v185 = vmax.f32 %v169, %v177
    %v186 = vmax.f32 %v170, %v178
    %v187 = vmax.f32 %v171, %v179
    %v188 = vmax.f32 %v172, %v180
    %v189 = vmax.f32 %v173, %v181
    %v190 = vmax.f32 %v174, %v182
    %v191 = vmax.f32 %v175, %v183
    %v192 = vpack.c.bf16 %v185, %v184
    %v193 = vpack.c.bf16 %v187, %v186
    %v194 = vpack.c.bf16 %v189, %v188
    %v195 = vpack.c.bf16 %v191, %v190
    %v196 = vld [vmem:[%s3] sm:$0xf]
    %v197 = vld [vmem:[%s3 + $0x4] sm:$0xf]
    %v198 = vld [vmem:[%s3 + $0x8] sm:$0xf]
    %v199 = vld [vmem:[%s3 + $0xc] sm:$0xf]
    %v200 = vld [vmem:[%s3 + $0x10] sm:$0xf]
    %v201 = vld [vmem:[%s3 + $0x14] sm:$0xf]
    %v202 = vld [vmem:[%s3 + $0x18] sm:$0xf]
    %v203 = vld [vmem:[%s3 + $0x1c] sm:$0xf]
    %v204 = vld [vmem:[%s3 + $0x20] sm:$0xf]
    %v205 = vld [vmem:[%s3 + $0x24] sm:$0xf]
    %v206 = vld [vmem:[%s3 + $0x28] sm:$0xf]
    %v207 = vld [vmem:[%s3 + $0x2c] sm:$0xf]
    %v208 = vld [vmem:[%s3 + $0x30] sm:$0xf]
    %v209 = vld [vmem:[%s3 + $0x34] sm:$0xf]
    %v210 = vld [vmem:[%s3 + $0x38] sm:$0xf]
    %v211 = vld [vmem:[%s3 + $0x3c] sm:$0xf]
    %v212 = vld [vmem:[%s4] sm:$0x1]
    %v214 = vperm.slane %v212, 0
    %v232 = vunpack.c.l.b16 %v196
    %v233 = vunpack.c.l.b16 %v197
    %v234 = vunpack.c.l.b16 %v198
    %v235 = vunpack.c.l.b16 %v199
    %v236 = vunpack.c.l.b16 %v200
    %v237 = vunpack.c.l.b16 %v201
    %v238 = vunpack.c.l.b16 %v202
    %v239 = vunpack.c.l.b16 %v203
    %v240 = vunpack.c.l.b16 %v204
    %v241 = vunpack.c.l.b16 %v205
    %v242 = vunpack.c.l.b16 %v206
    %v243 = vunpack.c.l.b16 %v207
    %v244 = vunpack.c.l.b16 %v208
    %v245 = vunpack.c.l.b16 %v209
    %v246 = vunpack.c.l.b16 %v210
    %v247 = vunpack.c.l.b16 %v211
    %v248 = vpack.c.b16 %v233, %v232
    %v249 = vpack.c.b16 %v235, %v234
    %v250 = vpack.c.b16 %v237, %v236
    %v251 = vpack.c.b16 %v239, %v238
    %v252 = vpack.c.b16 %v241, %v240
    %v253 = vpack.c.b16 %v243, %v242
    %v254 = vpack.c.b16 %v245, %v244
    %v255 = vpack.c.b16 %v247, %v246
    %264 = vmatpush.bf16.msra.mxu0 %v255
    %265 = vmatpush.bf16.msra.mxu0 %v254
    %266 = vmatpush.bf16.msra.mxu0 %v253
    %267 = vmatpush.bf16.msra.mxu0 %v252
    %268 = vmatpush.bf16.msra.mxu0 %v251
    %269 = vmatpush.bf16.msra.mxu0 %v250
    %270 = vmatpush.bf16.msra.mxu0 %v249
    %271 = vmatpush.bf16.msra.mxu0 %v248
    %272 = vmatmul.bf16.gmra.mxu0 %v192
    %v273 = vpop.f32.mrf.mxu0
    %v274 = vadd.f32 %v214, %v273
    %v275 = vpop.f32.mrf.mxu0
    %v276 = vadd.f32 %v214, %v275
    %277 = vmatmul.bf16.gmra.mxu0 %v193
    %v278 = vpop.f32.mrf.mxu0
    %v279 = vadd.f32 %v214, %v278
    %v280 = vpop.f32.mrf.mxu0
    %v281 = vadd.f32 %v214, %v280
    %282 = vmatmul.bf16.gmra.mxu0 %v194
    %v283 = vpop.f32.mrf.mxu0
    %v284 = vadd.f32 %v214, %v283
    %v285 = vpop.f32.mrf.mxu0
    %v286 = vadd.f32 %v214, %v285
    %287 = vmatmul.bf16.gmra.mxu0 %v195
    %v288 = vpop.f32.mrf.mxu0
    %v289 = vadd.f32 %v214, %v288
    %v290 = vpop.f32.mrf.mxu0
    %v291 = vadd.f32 %v214, %v290
    %292 = vdwg.mxu0
    %v293 = vmul.f32 %v274, 0.01
    %v294 = vmul.f32 %v276, 0.01
    %v295 = vmul.f32 %v279, 0.01
    %v296 = vmul.f32 %v281, 0.01
    %v297 = vmul.f32 %v284, 0.01
    %v298 = vmul.f32 %v286, 0.01
    %v299 = vmul.f32 %v289, 0.01
    %v300 = vmul.f32 %v291, 0.01
    %v301 = vmax.f32 %v274, %v293
    %v302 = vmax.f32 %v276, %v294
    %v303 = vmax.f32 %v279, %v295
    %v304 = vmax.f32 %v281, %v296
    %v305 = vmax.f32 %v284, %v297
    %v306 = vmax.f32 %v286, %v298
    %v307 = vmax.f32 %v289, %v299
    %v308 = vmax.f32 %v291, %v300
    %v309 = vpack.c.bf16 %v302, %v301
    %v310 = vpack.c.bf16 %v304, %v303
    %v311 = vpack.c.bf16 %v306, %v305
    %v312 = vpack.c.bf16 %v308, %v307
    %v313 = vld [vmem:[#allocation5] sm:$0xf]
    %v314 = vld [vmem:[#allocation5 + $0x4] sm:$0xf]
    %v315 = vld [vmem:[#allocation5 + $0x8] sm:$0xf]
    %v316 = vld [vmem:[#allocation5 + $0xc] sm:$0xf]
    %v317 = vld [vmem:[#allocation5 + $0x10] sm:$0xf]
    %v318 = vld [vmem:[#allocation5 + $0x14] sm:$0xf]
    %v319 = vld [vmem:[#allocation5 + $0x18] sm:$0xf]
    %v320 = vld [vmem:[#allocation5 + $0x1c] sm:$0xf]
    %v321 = vld [vmem:[#allocation5 + $0x20] sm:$0xf]
    %v322 = vld [vmem:[#allocation5 + $0x24] sm:$0xf]
    %v323 = vld [vmem:[#allocation5 + $0x28] sm:$0xf]
    %v324 = vld [vmem:[#allocation5 + $0x2c] sm:$0xf]
    %v325 = vld [vmem:[#allocation5 + $0x30] sm:$0xf]
    %v326 = vld [vmem:[#allocation5 + $0x34] sm:$0xf]
    %v327 = vld [vmem:[#allocation5 + $0x38] sm:$0xf]
    %v328 = vld [vmem:[#allocation5 + $0x3c] sm:$0xf]
    %v329 = vld [vmem:[%s6] sm:$0x1]
    %v331 = vperm.slane %v329, 0
    %v349 = vunpack.c.l.b16 %v313
    %v350 = vunpack.c.l.b16 %v314
    %v351 = vunpack.c.l.b16 %v315
    %v352 = vunpack.c.l.b16 %v316
    %v353 = vunpack.c.l.b16 %v317
    %v354 = vunpack.c.l.b16 %v318
    %v355 = vunpack.c.l.b16 %v319
    %v356 = vunpack.c.l.b16 %v320
    %v357 = vunpack.c.l.b16 %v321
    %v358 = vunpack.c.l.b16 %v322
    %v359 = vunpack.c.l.b16 %v323
    %v360 = vunpack.c.l.b16 %v324
    %v361 = vunpack.c.l.b16 %v325
    %v362 = vunpack.c.l.b16 %v326
    %v363 = vunpack.c.l.b16 %v327
    %v364 = vunpack.c.l.b16 %v328
    %v365 = vpack.c.b16 %v350, %v349
    %v366 = vpack.c.b16 %v352, %v351
    %v367 = vpack.c.b16 %v354, %v353
    %v368 = vpack.c.b16 %v356, %v355
    %v369 = vpack.c.b16 %v358, %v357
    %v370 = vpack.c.b16 %v360, %v359
    %v371 = vpack.c.b16 %v362, %v361
    %v372 = vpack.c.b16 %v364, %v363
    %381 = vmatpush.bf16.msra.mxu0 %v372
    %382 = vmatpush.bf16.msra.mxu0 %v371
    %383 = vmatpush.bf16.msra.mxu0 %v370
    %384 = vmatpush.bf16.msra.mxu0 %v369
    %385 = vmatpush.bf16.msra.mxu0 %v368
    %386 = vmatpush.bf16.msra.mxu0 %v367
    %387 = vmatpush.bf16.msra.mxu0 %v366
    %388 = vmatpush.bf16.msra.mxu0 %v365
    %389 = vmatmul.bf16.gmra.mxu0 %v309
    %v390 = vpop.f32.mrf.mxu0
    %v391 = vadd.f32 %v331, %v390
    %v392 = vpop.f32.mrf.mxu0
    %v393 = vadd.f32 %v331, %v392
    %394 = vmatmul.bf16.gmra.mxu0 %v310
    %v395 = vpop.f32.mrf.mxu0
    %v396 = vadd.f32 %v331, %v395
    %v397 = vpop.f32.mrf.mxu0
    %v398 = vadd.f32 %v331, %v397
    %399 = vmatmul.bf16.gmra.mxu0 %v311
    %v400 = vpop.f32.mrf.mxu0
    %v401 = vadd.f32 %v331, %v400
    %v402 = vpop.f32.mrf.mxu0
    %v403 = vadd.f32 %v331, %v402
    %404 = vmatmul.bf16.gmra.mxu0 %v312
    %v405 = vpop.f32.mrf.mxu0
    %v406 = vadd.f32 %v331, %v405
    %v407 = vpop.f32.mrf.mxu0
    %v408 = vadd.f32 %v331, %v407
    %409 = vdwg.mxu0
    %410 = vst [vmem:[#allocation7] sm:$0xff] %v391
    %411 = vst [vmem:[#allocation7 + $0x8] sm:$0xff] %v393
    %412 = vst [vmem:[#allocation7 + $0x10] sm:$0xff] %v396
    %413 = vst [vmem:[#allocation7 + $0x18] sm:$0xff] %v398
    %414 = vst [vmem:[#allocation7 + $0x20] sm:$0xff] %v401
    %415 = vst [vmem:[#allocation7 + $0x28] sm:$0xff] %v403
    %416 = vst [vmem:[#allocation7 + $0x30] sm:$0xff] %v406
    %417 = vst [vmem:[#allocation7 + $0x38] sm:$0xff] %v408
    // Predicated region
    $region38: #{tpu_custom_call.1} parent=1 // pred_check
      _
    $region39: #{tpu_custom_call.1} parent=1 // pred_check_branch
      %419 = sbr.rel (0) target = $region41
    $region40: #{tpu_custom_call.1} parent=1 // pred_region
      %421 = vsyncadd [#allocation4], 0
      %s422 = sshll.u32 [#allocation7], 4
      %s423 = int_to_ptr.vmem [resolvable:$true] %s422
      %s424 = sshll.u32 %s7, 4
      %s425 = int_to_ptr.hbm [resolvable:$true] %s424
      %430 = dma.vmem_to_hbm [thread:$0]  %s423, 1024, %s425, [#allocation4], 128, 128, 8
    $region41: #{tpu_custom_call.1} parent=1 // pred_fallthru
      _
    // Predicated region
    $region42: #{tpu_custom_call.1} parent=1 // pred_check
      _
    $region43: #{tpu_custom_call.1} parent=1 // pred_check_branch
      %432 = sbr.rel (0) target = $region45
    $region44: #{tpu_custom_call.1} parent=1 // pred_region
      %434 = dma.done [#allocation4], 1024
    $region45: #{tpu_custom_call.1} parent=1 // pred_fallthru
      _
    %435 = vsyncpa [#allocation3], 1
    %436 = vsyncpa [#allocation6], 1
    %437 = vsyncpa [#allocation4], 1

</llo_original>
